<compile_context>
chip_gen: v7x
topology: tpu7x:2x2x1
jax: 0.10.0
libtpu: 0.0.40
codegen_flags: <defaults>
</compile_context>

<pallas_src>
import functools
import math

import jax
import jax.numpy as jnp
from jax import lax
from jax.experimental import pallas as pl
from jax.experimental.pallas import tpu as pltpu

_LANE = 128
_SUBLANE = 8
_VMEM_BUDGET = 48 << 20   # safe under v7x's 64 MiB physical VMEM; fine on v5e/v6e
_MAX_TM = 512             # mem-bound kernels hit ~85% of HBM roofline at 512 rows


def _round_up(x, m):
    return ((x + m - 1) // m) * m


# ----------------------------- activations ---------------------------------

def _apply_activation(y, act, real_n):
    """Mirror of get_activation() semantics, applied in-kernel (f32)."""
    if act is None or act == "linear":
        return y
    elif act == "relu":
        return jnp.maximum(y, 0.0)
    elif act == "sigmoid":
        return jax.nn.sigmoid(y)
    elif act == "softplus":
        return jax.nn.softplus(y)
    elif act == "tanh":
        return jnp.tanh(y)
    elif act == "leakyrelu":
        # spec uses nn.LeakyReLU(0.2)
        return jnp.where(y >= 0.0, y, 0.2 * y)
    elif act == "softmax":
        # nn.Softmax(dim=1): softmax over the REAL (unpadded) feature columns.
        col = lax.broadcasted_iota(jnp.int32, y.shape, dimension=1)
        valid = col < real_n
        ym = jnp.where(valid, y, -jnp.inf)
        m = jnp.max(ym, axis=1, keepdims=True)
        e = jnp.exp(ym - m)
        denom = jnp.sum(e, axis=1, keepdims=True)
        return e / denom   # exact divide keeps the 1e-5 f32 tolerance
    elif act == "selu":
        alpha = 1.6732632423543772
        scale = 1.0507009873554805
        return scale * jnp.where(y > 0.0, y, alpha * (jnp.exp(y) - 1.0))
    elif act == "elu":
        return jnp.where(y > 0.0, y, jnp.exp(y) - 1.0)
    else:
        raise ValueError(f"Unexpected activation: {act}")


# ------------------------------ fused kernel --------------------------------

def _fused_mlp_kernel(x_ref, *refs, acts, real_ns, mxu_dtype):
    """Whole MLP in one kernel; intermediates live in vregs/VMEM only."""
    o_ref = refs[-1]
    wb = refs[:-1]  # w0, b0, w1, b1, ...
    y = x_ref[...].astype(jnp.float32)
    for i, act in enumerate(acts):
        w = wb[2 * i][...]                             # (K_i, N_pad_i), mxu_dtype
        b = wb[2 * i + 1][...].astype(jnp.float32)     # (1, N_pad_i), f32
        lhs = y if mxu_dtype == jnp.float32 else y.astype(mxu_dtype)
        y = jnp.dot(lhs, w, preferred_element_type=jnp.float32) + b
        y = _apply_activation(y, act, real_ns[i])
    o_ref[...] = y.astype(o_ref.dtype)


def fused_mlp(x2d, layers_padded, acts, real_ns, tm, mxu_dtype, cost):
    """y = act_L(...act_0(x @ W0^T + b0)...) as one pallas_call, tiled over M."""
    M, K = x2d.shape
    n_last = layers_padded[-1][0].shape[1]
    grid = (pl.cdiv(M, tm),)   # ragged tail rows are masked on write-back

    # x stream: last dim equals the FULL array dim -> no K padding / no HBM copy.
    in_specs = [pl.BlockSpec((tm, K), lambda i: (i, 0))]
    flat_params = []
    for w_t, b in layers_padded:
        kw, nw = w_t.shape
        # Grid-invariant -> DMA'd once; single-buffered to halve VMEM footprint.
        in_specs.append(pl.BlockSpec((kw, nw), lambda i: (0, 0),
                                     pipeline_mode=pl.Buffered(1)))
        in_specs.append(pl.BlockSpec((1, nw), lambda i: (0, 0),
                                     pipeline_mode=pl.Buffered(1)))
        flat_params.extend([w_t, b])
    out_spec = pl.BlockSpec((tm, n_last), lambda i: (i, 0))

    kernel = functools.partial(
        _fused_mlp_kernel, acts=tuple(acts), real_ns=tuple(real_ns),
        mxu_dtype=mxu_dtype)

    return pl.pallas_call(
        kernel,
        out_shape=jax.ShapeDtypeStruct((M, n_last), jnp.float32),
        grid=grid,
        in_specs=in_specs,
        out_specs=out_spec,
        compiler_params=pltpu.CompilerParams(
            dimension_semantics=("parallel",),   # shard M across v7x's 2 TCs
            vmem_limit_bytes=_VMEM_BUDGET),
        cost_estimate=cost,
    )(x2d, *flat_params)


# ------------------------------ FC_image ------------------------------------

class FCImagePallas:
    """JAX/Pallas re-implementation of FC_image (fused single-kernel MLP)."""

    def __init__(self, key, in_chan=784, out_chan=2, l_hidden=None,
                 activation=None, out_activation=None, out_chan_num=1,
                 mxu_dtype=jnp.float32):
        # mxu_dtype=jnp.bfloat16 halves weight HBM/VMEM traffic and uses the
        # 918/996 TF/s bf16 MXU on v6e/v7x (relax output tolerance to ~1e-2).
        self.in_chan = in_chan
        self.out_chan = out_chan
        self.out_chan_num = out_chan_num
        self.mxu_dtype = mxu_dtype

        l_neurons = list(l_hidden) + [out_chan]
        acts = list(activation) + [out_activation]
        self.acts = tuple(acts)
        self.real_ns = tuple(l_neurons)

        # Unpadded f32 params (reference) and lane-padded params (kernel).
        self.layers = []          # (W^T (K,N), b (1,N)) f32
        self.layers_padded = []   # (W^T (K_prev_pad, N_pad), b (1, N_pad))
        prev_dim = in_chan
        prev_pad = in_chan        # layer-0 K stays unpadded (x fed as-is)
        for n_hidden in l_neurons:
            key, kw, kb = jax.random.split(key, 3)
            bound = 1.0 / math.sqrt(prev_dim)  # torch Linear-like init
            w = jax.random.uniform(kw, (n_hidden, prev_dim), jnp.float32,
                                   minval=-bound, maxval=bound)
            b = jax.random.uniform(kb, (1, n_hidden), jnp.float32,
                                   minval=-bound, maxval=bound)
            w_t = jnp.transpose(w)  # (K, N)
            n_pad = _round_up(n_hidden, _LANE)
            w_t_pad = (jnp.zeros((prev_pad, n_pad), mxu_dtype)
                       .at[:prev_dim, :n_hidden].set(w_t.astype(mxu_dtype)))
            b_pad = jnp.zeros((1, n_pad), jnp.float32).at[:, :n_hidden].set(b)
            self.layers.append((w_t, b))
            self.layers_padded.append((w_t_pad, b_pad))
            prev_dim = n_hidden
            prev_pad = n_pad

        self._param_bytes = sum(
            w.size * w.dtype.itemsize + b.size * b.dtype.itemsize
            for w, b in self.layers_padded)
        # TODO(synk): if resident weights alone blow the VMEM budget (huge first
        # layer, e.g. 150K x 128 f32), a K-tiled first layer with an 'arbitrary'
        # grid axis + f32 accumulator scratch is needed; not implemented here.
        assert self._param_bytes <= _VMEM_BUDGET // 2, (
            "resident weights exceed the VMEM budget; K-tiled first layer "
            "fallback required")

    # -------- tile selection / cost model --------

    def _choose_tm(self, M, K):
        n_last = self.layers_padded[-1][0].shape[1]
        max_n = max(w.shape[1] for w, _ in self.layers_padded)

        def footprint(tm):
            x_blk = 2 * tm * K * 4            # double-buffered x stream (f32)
            o_blk = 2 * tm * n_last * 4       # double-buffered out stream (f32)
            act = 2 * tm * max_n * 4          # in-flight activations (estimate)
            return self._param_bytes + x_blk + o_blk + act

        if M <= _SUBLANE:
            return M                          # single block == full batch dim
        # >= 2 grid steps so both v7x TensorCores get work; otherwise as big as
        # the VMEM budget allows (big DMAs = main lever for a mem-bound kernel).
        tm = min(_round_up((M + 1) // 2, _SUBLANE), _MAX_TM)
        while tm > _SUBLANE and footprint(tm) > _VMEM_BUDGET:
            tm = _round_up(tm // 2, _SUBLANE)
        return tm

    def _cost_estimate(self, M, K):
        n_last = self.layers_padded[-1][0].shape[1]
        flops = 0
        transcendentals = 0
        bytes_accessed = M * K * 4 + M * n_last * 4 + self._param_bytes
        k_cur = K
        for (w_t, _), act in zip(self.layers_padded, self.acts):
            n = w_t.shape[1]
            flops += 2 * M * k_cur * n
            if act in ("sigmoid", "softplus", "tanh", "softmax", "selu", "elu"):
                transcendentals += M * n
            k_cur = n
        return pl.CostEstimate(flops=flops, transcendentals=transcendentals,
                               bytes_accessed=bytes_accessed)

    # -------- forward --------

    def _net(self, x2d):
        M, K = x2d.shape
        tm = self._choose_tm(M, K)
        out_pad = fused_mlp(x2d, self.layers_padded, self.acts, self.real_ns,
                            tm, self.mxu_dtype, self._cost_estimate(M, K))
        return out_pad[:, :self.real_ns[-1]].astype(x2d.dtype)

    def __call__(self, x):
        if x.ndim == 4:
            # NCHW -> (batch, C*H*W), same as torch x.view(-1, in_chan)
            x2d = x.reshape(-1, self.in_chan)
            return self._net(x2d)
        else:
            # TODO(synk): mirrors the torch code's latent bug — int(sqrt(...))
            # truncates for non-square out_chan/out_chan_num ratios.
            dim = int(math.sqrt(self.out_chan / self.out_chan_num))
            out = self._net(x)
            return out.reshape(-1, self.out_chan_num, dim, dim)


# -------------------------------- main ---------------------------------------

if __name__ == "__main__":
    key = jax.random.PRNGKey(0)
    k_in, k_params = jax.random.split(key)

    # small config consistent with the module's forward
    N, C, H, W = 2, 4, 16, 16
    in_chan = C * H * W                      # 1024
    l_hidden = [32, 32]
    activation = ["relu", "relu"]
    out_activation = "linear"
    out_chan = 2

    model = FCImagePallas(
        k_params, in_chan=in_chan, out_chan=out_chan, l_hidden=l_hidden,
        activation=activation, out_activation=out_activation, out_chan_num=1,
        mxu_dtype=jnp.float32,   # bf16 on v6e/v7x for perf (tolerance ~1e-2)
    )

    x = jax.random.normal(k_in, (N, C, H, W), jnp.float32)

    out = jax.block_until_ready(model(x))
    assert out.shape == (N, out_chan), out.shape

    # reference check in plain JAX (unpadded f32 params)
    ref = x.reshape(-1, in_chan)
    for (w_t, b), act in zip(model.layers, model.acts):
        ref = ref @ w_t + b
        if act == "relu":
            ref = jnp.maximum(ref, 0.0)
    assert jnp.allclose(out, ref, atol=1e-5, rtol=1e-5), (
        float(jnp.max(jnp.abs(out - ref))))

    print("KERNEL_OK")
</pallas_src>

<mosaic_0001>
module attributes {stable_mosaic.version = 11 : i64} {
  func.func @_fused_mlp_kernel(%arg0: i32, %arg1: memref<2x1024xf32, #tpu.memory_space<vmem>>, %arg2: memref<1024x128xf32, #tpu.memory_space<vmem>>, %arg3: memref<1x128xf32, #tpu.memory_space<vmem>>, %arg4: memref<128x128xf32, #tpu.memory_space<vmem>>, %arg5: memref<1x128xf32, #tpu.memory_space<vmem>>, %arg6: memref<128x128xf32, #tpu.memory_space<vmem>>, %arg7: memref<1x128xf32, #tpu.memory_space<vmem>>, %arg8: memref<2x128xf32, #tpu.memory_space<vmem>>) attributes {dimension_semantics = [#tpu.dimension_semantics<parallel>], iteration_bounds = array<i64: 1>, scalar_prefetch = 0 : i64, scratch_operands = 0 : i64, tpu.core_type = #tpu.core_type<tc>, window_params = [{transform_indices = @transform_0, window_bounds = array<i64: 2, 1024>}, {pipeline_mode = #tpu.pipeline_mode<synchronous>, transform_indices = @transform_1, window_bounds = array<i64: 1024, 128>}, {pipeline_mode = #tpu.pipeline_mode<synchronous>, transform_indices = @transform_2, window_bounds = array<i64: 1, 128>}, {pipeline_mode = #tpu.pipeline_mode<synchronous>, transform_indices = @transform_3, window_bounds = array<i64: 128, 128>}, {pipeline_mode = #tpu.pipeline_mode<synchronous>, transform_indices = @transform_4, window_bounds = array<i64: 1, 128>}, {pipeline_mode = #tpu.pipeline_mode<synchronous>, transform_indices = @transform_5, window_bounds = array<i64: 128, 128>}, {pipeline_mode = #tpu.pipeline_mode<synchronous>, transform_indices = @transform_6, window_bounds = array<i64: 1, 128>}, {transform_indices = @transform_7, window_bounds = array<i64: 2, 128>}]} {
    %c0 = arith.constant 0 : index
    %c0_0 = arith.constant 0 : index
    %0 = vector.load %arg1[%c0, %c0_0] : memref<2x1024xf32, #tpu.memory_space<vmem>>, vector<2x1024xf32>
    %c0_1 = arith.constant 0 : index
    %c0_2 = arith.constant 0 : index
    %1 = vector.load %arg2[%c0_1, %c0_2] : memref<1024x128xf32, #tpu.memory_space<vmem>>, vector<1024x128xf32>
    %c0_3 = arith.constant 0 : index
    %c0_4 = arith.constant 0 : index
    %2 = vector.load %arg3[%c0_3, %c0_4] : memref<1x128xf32, #tpu.memory_space<vmem>>, vector<1x128xf32>
    %cst = arith.constant dense<0.000000e+00> : vector<2x128xf32>
    %3 = tpu.matmul %0, %1, %cst {dimension_numbers = #tpu.dot_dimension_numbers<[1], [0], [0], [1], [0, 0, 1, 1], [], []>} : vector<2x1024xf32>, vector<1024x128xf32>, vector<2x128xf32> -> vector<2x128xf32>
    %4 = vector.broadcast %2 : vector<1x128xf32> to vector<2x128xf32>
    %5 = arith.addf %3, %4 : vector<2x128xf32>
    %cst_5 = arith.constant 0.000000e+00 : f32
    %6 = vector.broadcast %cst_5 : f32 to vector<2x128xf32>
    %7 = arith.maximumf %5, %6 : vector<2x128xf32>
    %c0_6 = arith.constant 0 : index
    %c0_7 = arith.constant 0 : index
    %8 = vector.load %arg4[%c0_6, %c0_7] : memref<128x128xf32, #tpu.memory_space<vmem>>, vector<128x128xf32>
    %c0_8 = arith.constant 0 : index
    %c0_9 = arith.constant 0 : index
    %9 = vector.load %arg5[%c0_8, %c0_9] : memref<1x128xf32, #tpu.memory_space<vmem>>, vector<1x128xf32>
    %cst_10 = arith.constant dense<0.000000e+00> : vector<2x128xf32>
    %10 = tpu.matmul %7, %8, %cst_10 {dimension_numbers = #tpu.dot_dimension_numbers<[1], [0], [0], [1], [0, 0, 1, 1], [], []>} : vector<2x128xf32>, vector<128x128xf32>, vector<2x128xf32> -> vector<2x128xf32>
    %11 = vector.broadcast %9 : vector<1x128xf32> to vector<2x128xf32>
    %12 = arith.addf %10, %11 : vector<2x128xf32>
    %cst_11 = arith.constant 0.000000e+00 : f32
    %13 = vector.broadcast %cst_11 : f32 to vector<2x128xf32>
    %14 = arith.maximumf %12, %13 : vector<2x128xf32>
    %c0_12 = arith.constant 0 : index
    %c0_13 = arith.constant 0 : index
    %15 = vector.load %arg6[%c0_12, %c0_13] : memref<128x128xf32, #tpu.memory_space<vmem>>, vector<128x128xf32>
    %c0_14 = arith.constant 0 : index
    %c0_15 = arith.constant 0 : index
    %16 = vector.load %arg7[%c0_14, %c0_15] : memref<1x128xf32, #tpu.memory_space<vmem>>, vector<1x128xf32>
    %cst_16 = arith.constant dense<0.000000e+00> : vector<2x128xf32>
    %17 = tpu.matmul %14, %15, %cst_16 {dimension_numbers = #tpu.dot_dimension_numbers<[1], [0], [0], [1], [0, 0, 1, 1], [], []>} : vector<2x128xf32>, vector<128x128xf32>, vector<2x128xf32> -> vector<2x128xf32>
    %18 = vector.broadcast %16 : vector<1x128xf32> to vector<2x128xf32>
    %19 = arith.addf %17, %18 : vector<2x128xf32>
    %c0_17 = arith.constant 0 : index
    %c0_18 = arith.constant 0 : index
    %20 = vector.load %arg8[%c0_17, %c0_18] : memref<2x128xf32, #tpu.memory_space<vmem>>, vector<2x128xf32>
    tpu.vector_store %arg8[%c0_17, %c0_18], %19 {strides = array<i32>} : memref<2x128xf32, #tpu.memory_space<vmem>>, vector<2x128xf32>,
    return
  }
  func.func @transform_0(%arg0: i32) -> (i32, i32) {
    %c0_i32 = arith.constant 0 : i32
    %c0_i32_0 = arith.constant 0 : i32
    return %arg0, %c0_i32 : i32, i32
  }
  func.func @transform_1(%arg0: i32) -> (i32, i32) {
    %c0_i32 = arith.constant 0 : i32
    %c0_i32_0 = arith.constant 0 : i32
    %c0_i32_1 = arith.constant 0 : i32
    return %c0_i32, %c0_i32_0 : i32, i32
  }
  func.func @transform_2(%arg0: i32) -> (i32, i32) {
    %c0_i32 = arith.constant 0 : i32
    %c0_i32_0 = arith.constant 0 : i32
    %c0_i32_1 = arith.constant 0 : i32
    return %c0_i32, %c0_i32_0 : i32, i32
  }
  func.func @transform_3(%arg0: i32) -> (i32, i32) {
    %c0_i32 = arith.constant 0 : i32
    %c0_i32_0 = arith.constant 0 : i32
    %c0_i32_1 = arith.constant 0 : i32
    return %c0_i32, %c0_i32_0 : i32, i32
  }
  func.func @transform_4(%arg0: i32) -> (i32, i32) {
    %c0_i32 = arith.constant 0 : i32
    %c0_i32_0 = arith.constant 0 : i32
    %c0_i32_1 = arith.constant 0 : i32
    return %c0_i32, %c0_i32_0 : i32, i32
  }
  func.func @transform_5(%arg0: i32) -> (i32, i32) {
    %c0_i32 = arith.constant 0 : i32
    %c0_i32_0 = arith.constant 0 : i32
    %c0_i32_1 = arith.constant 0 : i32
    return %c0_i32, %c0_i32_0 : i32, i32
  }
  func.func @transform_6(%arg0: i32) -> (i32, i32) {
    %c0_i32 = arith.constant 0 : i32
    %c0_i32_0 = arith.constant 0 : i32
    %c0_i32_1 = arith.constant 0 : i32
    return %c0_i32, %c0_i32_0 : i32, i32
  }
  func.func @transform_7(%arg0: i32) -> (i32, i32) {
    %c0_i32 = arith.constant 0 : i32
    %c0_i32_0 = arith.constant 0 : i32
    return %arg0, %c0_i32 : i32, i32
  }
}

</mosaic_0001>

<llo_original>
// kernel: tpu_custom_call.1
$region0: #{tpu_custom_call.1}
  #allocation0 [shape = 'u32[]', space=smem, size = 0x4, offset = 0x4, fixed_abs, tag = 'smem constant byte address 0x4 - core index']
  #allocation1 [shape = 'u32[144,128]{1,0:T(1,128)}', space=vmem, size = 0x12000, scoped, tag = 'internal scratch']
  %s0 = inlined_call_operand.hbm [shape: f32[2,1024], index: 0, kind: input, shape index: {}]
  %s1 = inlined_call_operand.hbm [shape: f32[1024,128], index: 1, kind: input, shape index: {}]
  %s2 = inlined_call_operand.vmem [shape: f32[1,128], index: 2, kind: input, shape index: {}]
  %s3 = inlined_call_operand.hbm [shape: f32[128,128], index: 3, kind: input, shape index: {}]
  %s4 = inlined_call_operand.vmem [shape: f32[1,128], index: 4, kind: input, shape index: {}]
  %s5 = inlined_call_operand.hbm [shape: f32[128,128], index: 5, kind: input, shape index: {}]
  %s6 = inlined_call_operand.vmem [shape: f32[1,128], index: 6, kind: input, shape index: {}]
  %s7 = inlined_call_operand.hbm [shape: f32[2,128], index: 7, kind: output, shape index: {}]
  %s8 = sld [smem:[#allocation0]]
  $region54: #{tpu_custom_call.1} parent=0
    _
  %s10 = ssub.s32 1, %s8
  %s11 = scalar_select 0, %s10, %s8
  $region1: #{tpu_custom_call.1} parent=0
    #allocation2 [shape = 'u8[8192]{0}', space=vmem, size = 0x2000, scoped, tag = 'input window, operand 0, single buffered']
    #allocation3 [shape = 's32[1]{0}', space=sflag, size = 0x4, scoped, tag = 'scoped memory for tpu_custom_call.1']
    #allocation4 [shape = 's32[1]{0}', space=sflag, size = 0x4, scoped, tag = 'scoped memory for tpu_custom_call.1']
    #allocation5 [shape = 'u8[524288]{0}', space=vmem, size = 0x80000, scoped, tag = 'input window, operand 1, single buffered']
    #allocation6 [shape = 's32[1]{0}', space=sflag, size = 0x4, scoped, tag = 'scoped memory for tpu_custom_call.1']
    #allocation7 [shape = 'u8[65536]{0}', space=vmem, size = 0x10000, scoped, tag = 'input window, operand 3, single buffered']
    #allocation8 [shape = 'u8[65536]{0}', space=vmem, size = 0x10000, scoped, tag = 'input window, operand 5, single buffered']
    #allocation9 [shape = 's32[1]{0}', space=sflag, size = 0x4, scoped, tag = 'scoped memory for tpu_custom_call.1']
    #allocation10 [shape = 'u8[1024]{0}', space=vmem, size = 0x400, scoped, tag = 'output window, operand 0, single buffered']
    %12 = vsyncpa [#allocation3], 0
    %13 = vsyncpa [#allocation6], 0
    %14 = vsyncpa [#allocation9], 0
    %15 = vsyncpa [#allocation4], 0
    // Predicated region
    $region2: #{tpu_custom_call.1} parent=1 // pred_check
      _
    $region3: #{tpu_custom_call.1} parent=1 // pred_check_branch
      %17 = sbr.rel (0) target = $region5
    $region4: #{tpu_custom_call.1} parent=1 // pred_region
      %s19 = ssub.s32 256, 256
      %20 = vsyncadd [#allocation3], %s19
      %s22 = sshll.u32 [#allocation2], 4
      %s23 = int_to_ptr.vmem [resolvable:$true] %s22
      %25 = dma.hbm_to_vmem [thread:$0]  %s0, 256, %s23, [#allocation3]
    $region5: #{tpu_custom_call.1} parent=1 // pred_fallthru
      _
    // Predicated region
    $region6: #{tpu_custom_call.1} parent=1 // pred_check
      _
    $region7: #{tpu_custom_call.1} parent=1 // pred_check_branch
      %27 = sbr.rel (0) target = $region9
    $region8: #{tpu_custom_call.1} parent=1 // pred_region
      %s29 = ssub.s32 16384, 16384
      %30 = vsyncadd [#allocation6], %s29
      %s31 = sshll.u32 [#allocation5], 4
      %s32 = int_to_ptr.vmem [resolvable:$true] %s31
      %37 = dma.hbm_to_vmem [thread:$0]  %s1, 16384, %s32, [#allocation6], 128, 128, 8
    $region9: #{tpu_custom_call.1} parent=1 // pred_fallthru
      _
    // Predicated region
    $region10: #{tpu_custom_call.1} parent=1 // pred_check
      _
    $region11: #{tpu_custom_call.1} parent=1 // pred_check_branch
      %39 = sbr.rel (0) target = $region13
    $region12: #{tpu_custom_call.1} parent=1 // pred_region
      _
    $region13: #{tpu_custom_call.1} parent=1 // pred_fallthru
      _
    // Predicated region
    $region14: #{tpu_custom_call.1} parent=1 // pred_check
      _
    $region15: #{tpu_custom_call.1} parent=1 // pred_check_branch
      %41 = sbr.rel (0) target = $region17
    $region16: #{tpu_custom_call.1} parent=1 // pred_region
      %s43 = ssub.s32 2048, 2048
      %44 = vsyncadd [#allocation6], %s43
      %s45 = sshll.u32 [#allocation7], 4
      %s46 = int_to_ptr.vmem [resolvable:$true] %s45
      %51 = dma.hbm_to_vmem [thread:$0]  %s3, 2048, %s46, [#allocation6], 128, 128, 8
    $region17: #{tpu_custom_call.1} parent=1 // pred_fallthru
      _
    // Predicated region
    $region18: #{tpu_custom_call.1} parent=1 // pred_check
      _
    $region19: #{tpu_custom_call.1} parent=1 // pred_check_branch
      %53 = sbr.rel (0) target = $region21
    $region20: #{tpu_custom_call.1} parent=1 // pred_region
      _
    $region21: #{tpu_custom_call.1} parent=1 // pred_fallthru
      _
    // Predicated region
    $region22: #{tpu_custom_call.1} parent=1 // pred_check
      _
    $region23: #{tpu_custom_call.1} parent=1 // pred_check_branch
      %55 = sbr.rel (0) target = $region25
    $region24: #{tpu_custom_call.1} parent=1 // pred_region
      %s57 = ssub.s32 2048, 2048
      %58 = vsyncadd [#allocation9], %s57
      %s59 = sshll.u32 [#allocation8], 4
      %s60 = int_to_ptr.vmem [resolvable:$true] %s59
      %65 = dma.hbm_to_vmem [thread:$0]  %s5, 2048, %s60, [#allocation9], 128, 128, 8
    $region25: #{tpu_custom_call.1} parent=1 // pred_fallthru
      _
    // Predicated region
    $region26: #{tpu_custom_call.1} parent=1 // pred_check
      _
    $region27: #{tpu_custom_call.1} parent=1 // pred_check_branch
      %67 = sbr.rel (0) target = $region29
    $region28: #{tpu_custom_call.1} parent=1 // pred_region
      _
    $region29: #{tpu_custom_call.1} parent=1 // pred_fallthru
      _
    // Predicated region
    $region30: #{tpu_custom_call.1} parent=1 // pred_check
      _
    $region31: #{tpu_custom_call.1} parent=1 // pred_check_branch
      %69 = sbr.rel (0) target = $region33
    $region32: #{tpu_custom_call.1} parent=1 // pred_region
      %70 = dma.done [#allocation3], 256
    $region33: #{tpu_custom_call.1} parent=1 // pred_fallthru
      _
    // Predicated region
    $region34: #{tpu_custom_call.1} parent=1 // pred_check
      _
    $region35: #{tpu_custom_call.1} parent=1 // pred_check_branch
      %72 = sbr.rel (0) target = $region37
    $region36: #{tpu_custom_call.1} parent=1 // pred_region
      %73 = dma.done [#allocation6], 16384
    $region37: #{tpu_custom_call.1} parent=1 // pred_fallthru
      _
    // Predicated region
    $region38: #{tpu_custom_call.1} parent=1 // pred_check
      _
    $region39: #{tpu_custom_call.1} parent=1 // pred_check_branch
      %75 = sbr.rel (0) target = $region41
    $region40: #{tpu_custom_call.1} parent=1 // pred_region
      %76 = dma.done [#allocation6], 2048
    $region41: #{tpu_custom_call.1} parent=1 // pred_fallthru
      _
    // Predicated region
    $region42: #{tpu_custom_call.1} parent=1 // pred_check
      _
    $region43: #{tpu_custom_call.1} parent=1 // pred_check_branch
      %78 = sbr.rel (0) target = $region45
    $region44: #{tpu_custom_call.1} parent=1 // pred_region
      %79 = dma.done [#allocation9], 2048
    $region45: #{tpu_custom_call.1} parent=1 // pred_fallthru
      _
    %v80 = vld [vmem:[#allocation2] sm:$0xff]
    %v81 = vld [vmem:[#allocation2 + $0x8] sm:$0xff]
    %v82 = vld [vmem:[#allocation5] sm:$0xff]
    %v83 = vld [vmem:[#allocation5 + $0x8] sm:$0xff]
    %v84 = vld [vmem:[#allocation5 + $0x10] sm:$0xff]
    %v85 = vld [vmem:[#allocation5 + $0x18] sm:$0xff]
    %v86 = vld [vmem:[#allocation5 + $0x20] sm:$0xff]
    %v87 = vld [vmem:[#allocation5 + $0x28] sm:$0xff]
    %v88 = vld [vmem:[#allocation5 + $0x30] sm:$0xff]
    %v89 = vld [vmem:[#allocation5 + $0x38] sm:$0xff]
    %v90 = vld [vmem:[#allocation5 + $0x40] sm:$0xff]
    %v91 = vld [vmem:[#allocation5 + $0x48] sm:$0xff]
    %v92 = vld [vmem:[#allocation5 + $0x50] sm:$0xff]
    %v93 = vld [vmem:[#allocation5 + $0x58] sm:$0xff]
    %v94 = vld [vmem:[#allocation5 + $0x60] sm:$0xff]
    %v95 = vld [vmem:[#allocation5 + $0x68] sm:$0xff]
    %v96 = vld [vmem:[#allocation5 + $0x70] sm:$0xff]
    %v97 = vld [vmem:[#allocation5 + $0x78] sm:$0xff]
    %v98 = vld [vmem:[#allocation5 + $0x80] sm:$0xff]
    %v99 = vld [vmem:[#allocation5 + $0x88] sm:$0xff]
    %v100 = vld [vmem:[#allocation5 + $0x90] sm:$0xff]
    %v101 = vld [vmem:[#allocation5 + $0x98] sm:$0xff]
    %v102 = vld [vmem:[#allocation5 + $0xa0] sm:$0xff]
    %v103 = vld [vmem:[#allocation5 + $0xa8] sm:$0xff]
    %v104 = vld [vmem:[#allocation5 + $0xb0] sm:$0xff]
    %v105 = vld [vmem:[#allocation5 + $0xb8] sm:$0xff]
    %v106 = vld [vmem:[#allocation5 + $0xc0] sm:$0xff]
    %v107 = vld [vmem:[#allocation5 + $0xc8] sm:$0xff]
    %v108 = vld [vmem:[#allocation5 + $0xd0] sm:$0xff]
    %v109 = vld [vmem:[#allocation5 + $0xd8] sm:$0xff]
    %v110 = vld [vmem:[#allocation5 + $0xe0] sm:$0xff]
    %v111 = vld [vmem:[#allocation5 + $0xe8] sm:$0xff]
    %v112 = vld [vmem:[#allocation5 + $0xf0] sm:$0xff]
    %v113 = vld [vmem:[#allocation5 + $0xf8] sm:$0xff]
    %v114 = vld [vmem:[#allocation5 + $0x100] sm:$0xff]
    %v115 = vld [vmem:[#allocation5 + $0x108] sm:$0xff]
    %v116 = vld [vmem:[#allocation5 + $0x110] sm:$0xff]
    %v117 = vld [vmem:[#allocation5 + $0x118] sm:$0xff]
    %v118 = vld [vmem:[#allocation5 + $0x120] sm:$0xff]
    %v119 = vld [vmem:[#allocation5 + $0x128] sm:$0xff]
    %v120 = vld [vmem:[#allocation5 + $0x130] sm:$0xff]
    %v121 = vld [vmem:[#allocation5 + $0x138] sm:$0xff]
    %v122 = vld [vmem:[#allocation5 + $0x140] sm:$0xff]
    %v123 = vld [vmem:[#allocation5 + $0x148] sm:$0xff]
    %v124 = vld [vmem:[#allocation5 + $0x150] sm:$0xff]
    %v125 = vld [vmem:[#allocation5 + $0x158] sm:$0xff]
    %v126 = vld [vmem:[#allocation5 + $0x160] sm:$0xff]
    %v127 = vld [vmem:[#allocation5 + $0x168] sm:$0xff]
    %v128 = vld [vmem:[#allocation5 + $0x170] sm:$0xff]
    %v129 = vld [vmem:[#allocation5 + $0x178] sm:$0xff]
    %v130 = vld [vmem:[#allocation5 + $0x180] sm:$0xff]
    %v131 = vld [vmem:[#allocation5 + $0x188] sm:$0xff]
    %v132 = vld [vmem:[#allocation5 + $0x190] sm:$0xff]
    %v133 = vld [vmem:[#allocation5 + $0x198] sm:$0xff]
    %v134 = vld [vmem:[#allocation5 + $0x1a0] sm:$0xff]
    %v135 = vld [vmem:[#allocation5 + $0x1a8] sm:$0xff]
    %v136 = vld [vmem:[#allocation5 + $0x1b0] sm:$0xff]
    %v137 = vld [vmem:[#allocation5 + $0x1b8] sm:$0xff]
    %v138 = vld [vmem:[#allocation5 + $0x1c0] sm:$0xff]
    %v139 = vld [vmem:[#allocation5 + $0x1c8] sm:$0xff]
    %v140 = vld [vmem:[#allocation5 + $0x1d0] sm:$0xff]
    %v141 = vld [vmem:[#allocation5 + $0x1d8] sm:$0xff]
    %v142 = vld [vmem:[#allocation5 + $0x1e0] sm:$0xff]
    %v143 = vld [vmem:[#allocation5 + $0x1e8] sm:$0xff]
    %v144 = vld [vmem:[#allocation5 + $0x1f0] sm:$0xff]
    %v145 = vld [vmem:[#allocation5 + $0x1f8] sm:$0xff]
    %v146 = vld [vmem:[#allocation5 + $0x200] sm:$0xff]
    %v147 = vld [vmem:[#allocation5 + $0x208] sm:$0xff]
    %v148 = vld [vmem:[#allocation5 + $0x210] sm:$0xff]
    %v149 = vld [vmem:[#allocation5 + $0x218] sm:$0xff]
    %v150 = vld [vmem:[#allocation5 + $0x220] sm:$0xff]
    %v151 = vld [vmem:[#allocation5 + $0x228] sm:$0xff]
    %v152 = vld [vmem:[#allocation5 + $0x230] sm:$0xff]
    %v153 = vld [vmem:[#allocation5 + $0x238] sm:$0xff]
    %v154 = vld [vmem:[#allocation5 + $0x240] sm:$0xff]
    %v155 = vld [vmem:[#allocation5 + $0x248] sm:$0xff]
    %v156 = vld [vmem:[#allocation5 + $0x250] sm:$0xff]
    %v157 = vld [vmem:[#allocation5 + $0x258] sm:$0xff]
    %v158 = vld [vmem:[#allocation5 + $0x260] sm:$0xff]
    %v159 = vld [vmem:[#allocation5 + $0x268] sm:$0xff]
    %v160 = vld [vmem:[#allocation5 + $0x270] sm:$0xff]
    %v161 = vld [vmem:[#allocation5 + $0x278] sm:$0xff]
    %v162 = vld [vmem:[#allocation5 + $0x280] sm:$0xff]
    %v163 = vld [vmem:[#allocation5 + $0x288] sm:$0xff]
    %v164 = vld [vmem:[#allocation5 + $0x290] sm:$0xff]
    %v165 = vld [vmem:[#allocation5 + $0x298] sm:$0xff]
    %v166 = vld [vmem:[#allocation5 + $0x2a0] sm:$0xff]
    %v167 = vld [vmem:[#allocation5 + $0x2a8] sm:$0xff]
    %v168 = vld [vmem:[#allocation5 + $0x2b0] sm:$0xff]
    %v169 = vld [vmem:[#allocation5 + $0x2b8] sm:$0xff]
    %v170 = vld [vmem:[#allocation5 + $0x2c0] sm:$0xff]
    %v171 = vld [vmem:[#allocation5 + $0x2c8] sm:$0xff]
    %v172 = vld [vmem:[#allocation5 + $0x2d0] sm:$0xff]
    %v173 = vld [vmem:[#allocation5 + $0x2d8] sm:$0xff]
    %v174 = vld [vmem:[#allocation5 + $0x2e0] sm:$0xff]
    %v175 = vld [vmem:[#allocation5 + $0x2e8] sm:$0xff]
    %v176 = vld [vmem:[#allocation5 + $0x2f0] sm:$0xff]
    %v177 = vld [vmem:[#allocation5 + $0x2f8] sm:$0xff]
    %v178 = vld [vmem:[#allocation5 + $0x300] sm:$0xff]
    %v179 = vld [vmem:[#allocation5 + $0x308] sm:$0xff]
    %v180 = vld [vmem:[#allocation5 + $0x310] sm:$0xff]
    %v181 = vld [vmem:[#allocation5 + $0x318] sm:$0xff]
    %v182 = vld [vmem:[#allocation5 + $0x320] sm:$0xff]
    %v183 = vld [vmem:[#allocation5 + $0x328] sm:$0xff]
    %v184 = vld [vmem:[#allocation5 + $0x330] sm:$0xff]
    %v185 = vld [vmem:[#allocation5 + $0x338] sm:$0xff]
    %v186 = vld [vmem:[#allocation5 + $0x340] sm:$0xff]
    %v187 = vld [vmem:[#allocation5 + $0x348] sm:$0xff]
    %v188 = vld [vmem:[#allocation5 + $0x350] sm:$0xff]
    %v189 = vld [vmem:[#allocation5 + $0x358] sm:$0xff]
    %v190 = vld [vmem:[#allocation5 + $0x360] sm:$0xff]
    %v191 = vld [vmem:[#allocation5 + $0x368] sm:$0xff]
    %v192 = vld [vmem:[#allocation5 + $0x370] sm:$0xff]
    %v193 = vld [vmem:[#allocation5 + $0x378] sm:$0xff]
    %v194 = vld [vmem:[#allocation5 + $0x380] sm:$0xff]
    %v195 = vld [vmem:[#allocation5 + $0x388] sm:$0xff]
    %v196 = vld [vmem:[#allocation5 + $0x390] sm:$0xff]
    %v197 = vld [vmem:[#allocation5 + $0x398] sm:$0xff]
    %v198 = vld [vmem:[#allocation5 + $0x3a0] sm:$0xff]
    %v199 = vld [vmem:[#allocation5 + $0x3a8] sm:$0xff]
    %v200 = vld [vmem:[#allocation5 + $0x3b0] sm:$0xff]
    %v201 = vld [vmem:[#allocation5 + $0x3b8] sm:$0xff]
    %v202 = vld [vmem:[#allocation5 + $0x3c0] sm:$0xff]
    %v203 = vld [vmem:[#allocation5 + $0x3c8] sm:$0xff]
    %v204 = vld [vmem:[#allocation5 + $0x3d0] sm:$0xff]
    %v205 = vld [vmem:[#allocation5 + $0x3d8] sm:$0xff]
    %v206 = vld [vmem:[#allocation5 + $0x3e0] sm:$0xff]
    %v207 = vld [vmem:[#allocation5 + $0x3e8] sm:$0xff]
    %v208 = vld [vmem:[#allocation5 + $0x3f0] sm:$0xff]
    %v209 = vld [vmem:[#allocation5 + $0x3f8] sm:$0xff]
    %v210 = vld [vmem:[%s2] sm:$0x1]
    %v212 = vlaneseq
    %v213 = vshrl.u32 %v212, 7
    %v214 = vsub.s32 0, %v213
    %v215 = vrot.slane %v210, %v214
    %v219 = vcombine.high %v80, %v80
    %v221 = vunpack.c.l.s4 1983009808
    %v222 = vunpack.c.0.s8 %v221
    %v223 = vlaneseq
    %v224 = vshrl.u32 %v223, 7
    %v225 = vsub.s32 %v222, %v224
    %v226 = vrot.slane %v80, %v225
    %v228 = vunpack.c.l.s4 1983009808
    %v229 = vunpack.c.0.s8 %v228
    %v230 = vlaneseq
    %v231 = vshrl.u32 %v230, 7
    %v232 = vsub.s32 %v229, %v231
    %v233 = vrot.slane %v219, %v232
    %v234 = vcombine.high %v226, %v226
    %v235 = vcombine.high %v233, %v233
    %v236 = vcombine.high %v81, %v81
    %v238 = vunpack.c.l.s4 1983009808
    %v239 = vunpack.c.0.s8 %v238
    %v240 = vlaneseq
    %v241 = vshrl.u32 %v240, 7
    %v242 = vsub.s32 %v239, %v241
    %v243 = vrot.slane %v81, %v242
    %v245 = vunpack.c.l.s4 1983009808
    %v246 = vunpack.c.0.s8 %v245
    %v247 = vlaneseq
    %v248 = vshrl.u32 %v247, 7
    %v249 = vsub.s32 %v246, %v248
    %v250 = vrot.slane %v236, %v249
    %v251 = vcombine.high %v243, %v243
    %v252 = vcombine.high %v250, %v250
    %261 = vmatprep.subr.mxu0 0.0
    %262 = vmatpush1.msra.mxu0 %v82
    %263 = vmatprep.subr.mxu0 0.0
    %264 = vmatpush1.msra.mxu0 %v83
    %265 = vmatprep.subr.mxu0 0.0
    %266 = vmatpush1.msra.mxu0 %v84
    %267 = vmatprep.subr.mxu0 0.0
    %268 = vmatpush1.msra.mxu0 %v85
    %269 = vmatprep.subr.mxu0 0.0
    %270 = vmatpush1.msra.mxu0 %v86
    %271 = vmatprep.subr.mxu0 0.0
    %272 = vmatpush1.msra.mxu0 %v87
    %273 = vmatprep.subr.mxu0 0.0
    %274 = vmatpush1.msra.mxu0 %v88
    %275 = vmatprep.subr.mxu0 0.0
    %276 = vmatpush1.msra.mxu0 %v89
    %277 = vmatprep.subr.mxu0 0.0
    %278 = vmatpush1.msra.mxu0 %v90
    %279 = vmatprep.subr.mxu0 0.0
    %280 = vmatpush1.msra.mxu0 %v91
    %281 = vmatprep.subr.mxu0 0.0
    %282 = vmatpush1.msra.mxu0 %v92
    %283 = vmatprep.subr.mxu0 0.0
    %284 = vmatpush1.msra.mxu0 %v93
    %285 = vmatprep.subr.mxu0 0.0
    %286 = vmatpush1.msra.mxu0 %v94
    %287 = vmatprep.subr.mxu0 0.0
    %288 = vmatpush1.msra.mxu0 %v95
    %289 = vmatprep.subr.mxu0 0.0
    %290 = vmatpush1.msra.mxu0 %v96
    %291 = vmatprep.subr.mxu0 0.0
    %292 = vmatpush1.msra.mxu0 %v97
    %293 = vmatprep.subr.mxu0 0.0
    %294 = vmatpush1.msra.mxu0 %v98
    %295 = vmatprep.subr.mxu0 0.0
    %296 = vmatpush1.msra.mxu0 %v99
    %297 = vmatprep.subr.mxu0 0.0
    %298 = vmatpush1.msra.mxu0 %v100
    %299 = vmatprep.subr.mxu0 0.0
    %300 = vmatpush1.msra.mxu0 %v101
    %301 = vmatprep.subr.mxu0 0.0
    %302 = vmatpush1.msra.mxu0 %v102
    %303 = vmatprep.subr.mxu0 0.0
    %304 = vmatpush1.msra.mxu0 %v103
    %305 = vmatprep.subr.mxu0 0.0
    %306 = vmatpush1.msra.mxu0 %v104
    %307 = vmatprep.subr.mxu0 0.0
    %308 = vmatpush1.msra.mxu0 %v105
    %309 = vmatprep.subr.mxu0 0.0
    %310 = vmatpush1.msra.mxu0 %v106
    %311 = vmatprep.subr.mxu0 0.0
    %312 = vmatpush1.msra.mxu0 %v107
    %313 = vmatprep.subr.mxu0 0.0
    %314 = vmatpush1.msra.mxu0 %v108
    %315 = vmatprep.subr.mxu0 0.0
    %316 = vmatpush1.msra.mxu0 %v109
    %317 = vmatprep.subr.mxu0 0.0
    %318 = vmatpush1.msra.mxu0 %v110
    %319 = vmatprep.subr.mxu0 0.0
    %320 = vmatpush1.msra.mxu0 %v111
    %321 = vmatprep.subr.mxu0 0.0
    %322 = vmatpush1.msra.mxu0 %v112
    %323 = vmatprep.subr.mxu0 0.0
    %324 = vmatpush1.msra.mxu0 %v113
    %325 = vmatprep.mubr.f32.mxu0 %v234
    %326 = vmatmul.mubr.f32.gmra.mrb[0].mxu0 %v226
    %v327 = vpop.f32.mrb[0].mxu0
    %v328 = vadd.f32 %v215, %v327
    %v329 = vpop.f32.mrb[0].mxu0
    %330 = vdwg.mxu0
    %331 = vmatprep.subr.mxu0 0.0
    %332 = vmatpush1.msra.mxu0 %v114
    %333 = vmatprep.subr.mxu0 0.0
    %334 = vmatpush1.msra.mxu0 %v115
    %335 = vmatprep.subr.mxu0 0.0
    %336 = vmatpush1.msra.mxu0 %v116
    %337 = vmatprep.subr.mxu0 0.0
    %338 = vmatpush1.msra.mxu0 %v117
    %339 = vmatprep.subr.mxu0 0.0
    %340 = vmatpush1.msra.mxu0 %v118
    %341 = vmatprep.subr.mxu0 0.0
    %342 = vmatpush1.msra.mxu0 %v119
    %343 = vmatprep.subr.mxu0 0.0
    %344 = vmatpush1.msra.mxu0 %v120
    %345 = vmatprep.subr.mxu0 0.0
    %346 = vmatpush1.msra.mxu0 %v121
    %347 = vmatprep.subr.mxu0 0.0
    %348 = vmatpush1.msra.mxu0 %v122
    %349 = vmatprep.subr.mxu0 0.0
    %350 = vmatpush1.msra.mxu0 %v123
    %351 = vmatprep.subr.mxu0 0.0
    %352 = vmatpush1.msra.mxu0 %v124
    %353 = vmatprep.subr.mxu0 0.0
    %354 = vmatpush1.msra.mxu0 %v125
    %355 = vmatprep.subr.mxu0 0.0
    %356 = vmatpush1.msra.mxu0 %v126
    %357 = vmatprep.subr.mxu0 0.0
    %358 = vmatpush1.msra.mxu0 %v127
    %359 = vmatprep.subr.mxu0 0.0
    %360 = vmatpush1.msra.mxu0 %v128
    %361 = vmatprep.subr.mxu0 0.0
    %362 = vmatpush1.msra.mxu0 %v129
    %363 = vmatprep.subr.mxu0 0.0
    %364 = vmatpush1.msra.mxu0 %v130
    %365 = vmatprep.subr.mxu0 0.0
    %366 = vmatpush1.msra.mxu0 %v131
    %367 = vmatprep.subr.mxu0 0.0
    %368 = vmatpush1.msra.mxu0 %v132
    %369 = vmatprep.subr.mxu0 0.0
    %370 = vmatpush1.msra.mxu0 %v133
    %371 = vmatprep.subr.mxu0 0.0
    %372 = vmatpush1.msra.mxu0 %v134
    %373 = vmatprep.subr.mxu0 0.0
    %374 = vmatpush1.msra.mxu0 %v135
    %375 = vmatprep.subr.mxu0 0.0
    %376 = vmatpush1.msra.mxu0 %v136
    %377 = vmatprep.subr.mxu0 0.0
    %378 = vmatpush1.msra.mxu0 %v137
    %379 = vmatprep.subr.mxu0 0.0
    %380 = vmatpush1.msra.mxu0 %v138
    %381 = vmatprep.subr.mxu0 0.0
    %382 = vmatpush1.msra.mxu0 %v139
    %383 = vmatprep.subr.mxu0 0.0
    %384 = vmatpush1.msra.mxu0 %v140
    %385 = vmatprep.subr.mxu0 0.0
    %386 = vmatpush1.msra.mxu0 %v141
    %387 = vmatprep.subr.mxu0 0.0
    %388 = vmatpush1.msra.mxu0 %v142
    %389 = vmatprep.subr.mxu0 0.0
    %390 = vmatpush1.msra.mxu0 %v143
    %391 = vmatprep.subr.mxu0 0.0
    %392 = vmatpush1.msra.mxu0 %v144
    %393 = vmatprep.subr.mxu0 0.0
    %394 = vmatpush1.msra.mxu0 %v145
    %395 = vmatprep.mubr.f32.mxu0 %v235
    %396 = vmatmul.mubr.f32.gmra.mrb[0].mxu0 %v233
    %v397 = vpop.f32.mrb[0].mxu0
    %v398 = vadd.f32 %v328, %v397
    %v399 = vpop.f32.mrb[0].mxu0
    %400 = vdwg.mxu0
    %401 = vmatprep.subr.mxu0 0.0
    %402 = vmatpush1.msra.mxu0 %v146
    %403 = vmatprep.subr.mxu0 0.0
    %404 = vmatpush1.msra.mxu0 %v147
    %405 = vmatprep.subr.mxu0 0.0
    %406 = vmatpush1.msra.mxu0 %v148
    %407 = vmatprep.subr.mxu0 0.0
    %408 = vmatpush1.msra.mxu0 %v149
    %409 = vmatprep.subr.mxu0 0.0
    %410 = vmatpush1.msra.mxu0 %v150
    %411 = vmatprep.subr.mxu0 0.0
    %412 = vmatpush1.msra.mxu0 %v151
    %413 = vmatprep.subr.mxu0 0.0
    %414 = vmatpush1.msra.mxu0 %v152
    %415 = vmatprep.subr.mxu0 0.0
    %416 = vmatpush1.msra.mxu0 %v153
    %417 = vmatprep.subr.mxu0 0.0
    %418 = vmatpush1.msra.mxu0 %v154
    %419 = vmatprep.subr.mxu0 0.0
    %420 = vmatpush1.msra.mxu0 %v155
    %421 = vmatprep.subr.mxu0 0.0
    %422 = vmatpush1.msra.mxu0 %v156
    %423 = vmatprep.subr.mxu0 0.0
    %424 = vmatpush1.msra.mxu0 %v157
    %425 = vmatprep.subr.mxu0 0.0
    %426 = vmatpush1.msra.mxu0 %v158
    %427 = vmatprep.subr.mxu0 0.0
    %428 = vmatpush1.msra.mxu0 %v159
    %429 = vmatprep.subr.mxu0 0.0
    %430 = vmatpush1.msra.mxu0 %v160
    %431 = vmatprep.subr.mxu0 0.0
    %432 = vmatpush1.msra.mxu0 %v161
    %433 = vmatprep.subr.mxu0 0.0
    %434 = vmatpush1.msra.mxu0 %v162
    %435 = vmatprep.subr.mxu0 0.0
    %436 = vmatpush1.msra.mxu0 %v163
    %437 = vmatprep.subr.mxu0 0.0
    %438 = vmatpush1.msra.mxu0 %v164
    %439 = vmatprep.subr.mxu0 0.0
    %440 = vmatpush1.msra.mxu0 %v165
    %441 = vmatprep.subr.mxu0 0.0
    %442 = vmatpush1.msra.mxu0 %v166
    %443 = vmatprep.subr.mxu0 0.0
    %444 = vmatpush1.msra.mxu0 %v167
    %445 = vmatprep.subr.mxu0 0.0
    %446 = vmatpush1.msra.mxu0 %v168
    %447 = vmatprep.subr.mxu0 0.0
    %448 = vmatpush1.msra.mxu0 %v169
    %449 = vmatprep.subr.mxu0 0.0
    %450 = vmatpush1.msra.mxu0 %v170
    %451 = vmatprep.subr.mxu0 0.0
    %452 = vmatpush1.msra.mxu0 %v171
    %453 = vmatprep.subr.mxu0 0.0
    %454 = vmatpush1.msra.mxu0 %v172
    %455 = vmatprep.subr.mxu0 0.0
    %456 = vmatpush1.msra.mxu0 %v173
    %457 = vmatprep.subr.mxu0 0.0
    %458 = vmatpush1.msra.mxu0 %v174
    %459 = vmatprep.subr.mxu0 0.0
    %460 = vmatpush1.msra.mxu0 %v175
    %461 = vmatprep.subr.mxu0 0.0
    %462 = vmatpush1.msra.mxu0 %v176
    %463 = vmatprep.subr.mxu0 0.0
    %464 = vmatpush1.msra.mxu0 %v177
    %465 = vmatprep.mubr.f32.mxu0 %v251
    %466 = vmatmul.mubr.f32.gmra.mrb[0].mxu0 %v243
    %v467 = vpop.f32.mrb[0].mxu0
    %v468 = vadd.f32 %v398, %v467
    %v469 = vpop.f32.mrb[0].mxu0
    %470 = vdwg.mxu0
    %471 = vmatprep.subr.mxu0 0.0
    %472 = vmatpush1.msra.mxu0 %v178
    %473 = vmatprep.subr.mxu0 0.0
    %474 = vmatpush1.msra.mxu0 %v179
    %475 = vmatprep.subr.mxu0 0.0
    %476 = vmatpush1.msra.mxu0 %v180
    %477 = vmatprep.subr.mxu0 0.0
    %478 = vmatpush1.msra.mxu0 %v181
    %479 = vmatprep.subr.mxu0 0.0
    %480 = vmatpush1.msra.mxu0 %v182
    %481 = vmatprep.subr.mxu0 0.0
    %482 = vmatpush1.msra.mxu0 %v183
    %483 = vmatprep.subr.mxu0 0.0
    %484 = vmatpush1.msra.mxu0 %v184
    %485 = vmatprep.subr.mxu0 0.0
    %486 = vmatpush1.msra.mxu0 %v185
    %487 = vmatprep.subr.mxu0 0.0
    %488 = vmatpush1.msra.mxu0 %v186
    %489 = vmatprep.subr.mxu0 0.0
    %490 = vmatpush1.msra.mxu0 %v187
    %491 = vmatprep.subr.mxu0 0.0
    %492 = vmatpush1.msra.mxu0 %v188
    %493 = vmatprep.subr.mxu0 0.0
    %494 = vmatpush1.msra.mxu0 %v189
    %495 = vmatprep.subr.mxu0 0.0
    %496 = vmatpush1.msra.mxu0 %v190
    %497 = vmatprep.subr.mxu0 0.0
    %498 = vmatpush1.msra.mxu0 %v191
    %499 = vmatprep.subr.mxu0 0.0
    %500 = vmatpush1.msra.mxu0 %v192
    %501 = vmatprep.subr.mxu0 0.0
    %502 = vmatpush1.msra.mxu0 %v193
    %503 = vmatprep.subr.mxu0 0.0
    %504 = vmatpush1.msra.mxu0 %v194
    %505 = vmatprep.subr.mxu0 0.0
    %506 = vmatpush1.msra.mxu0 %v195
    %507 = vmatprep.subr.mxu0 0.0
    %508 = vmatpush1.msra.mxu0 %v196
    %509 = vmatprep.subr.mxu0 0.0
    %510 = vmatpush1.msra.mxu0 %v197
    %511 = vmatprep.subr.mxu0 0.0
    %512 = vmatpush1.msra.mxu0 %v198
    %513 = vmatprep.subr.mxu0 0.0
    %514 = vmatpush1.msra.mxu0 %v199
    %515 = vmatprep.subr.mxu0 0.0
    %516 = vmatpush1.msra.mxu0 %v200
    %517 = vmatprep.subr.mxu0 0.0
    %518 = vmatpush1.msra.mxu0 %v201
    %519 = vmatprep.subr.mxu0 0.0
    %520 = vmatpush1.msra.mxu0 %v202
    %521 = vmatprep.subr.mxu0 0.0
    %522 = vmatpush1.msra.mxu0 %v203
    %523 = vmatprep.subr.mxu0 0.0
    %524 = vmatpush1.msra.mxu0 %v204
    %525 = vmatprep.subr.mxu0 0.0
    %526 = vmatpush1.msra.mxu0 %v205
    %527 = vmatprep.subr.mxu0 0.0
    %528 = vmatpush1.msra.mxu0 %v206
    %529 = vmatprep.subr.mxu0 0.0
    %530 = vmatpush1.msra.mxu0 %v207
    %531 = vmatprep.subr.mxu0 0.0
    %532 = vmatpush1.msra.mxu0 %v208
    %533 = vmatprep.subr.mxu0 0.0
    %534 = vmatpush1.msra.mxu0 %v209
    %535 = vmatprep.mubr.f32.mxu0 %v252
    %536 = vmatmul.mubr.f32.gmra.mrb[0].mxu0 %v250
    %v537 = vpop.f32.mrb[0].mxu0
    %v538 = vadd.f32 %v468, %v537
    %v539 = vpop.f32.mrb[0].mxu0
    %540 = vdwg.mxu0
    %v541 = vmax.f32 %v538, 0.0
    %v542 = vld [vmem:[#allocation7] sm:$0xff]
    %v543 = vld [vmem:[#allocation7 + $0x8] sm:$0xff]
    %v544 = vld [vmem:[#allocation7 + $0x10] sm:$0xff]
    %v545 = vld [vmem:[#allocation7 + $0x18] sm:$0xff]
    %v546 = vld [vmem:[#allocation7 + $0x20] sm:$0xff]
    %v547 = vld [vmem:[#allocation7 + $0x28] sm:$0xff]
    %v548 = vld [vmem:[#allocation7 + $0x30] sm:$0xff]
    %v549 = vld [vmem:[#allocation7 + $0x38] sm:$0xff]
    %v550 = vld [vmem:[#allocation7 + $0x40] sm:$0xff]
    %v551 = vld [vmem:[#allocation7 + $0x48] sm:$0xff]
    %v552 = vld [vmem:[#allocation7 + $0x50] sm:$0xff]
    %v553 = vld [vmem:[#allocation7 + $0x58] sm:$0xff]
    %v554 = vld [vmem:[#allocation7 + $0x60] sm:$0xff]
    %v555 = vld [vmem:[#allocation7 + $0x68] sm:$0xff]
    %v556 = vld [vmem:[#allocation7 + $0x70] sm:$0xff]
    %v557 = vld [vmem:[#allocation7 + $0x78] sm:$0xff]
    %v558 = vld [vmem:[%s4] sm:$0x1]
    %v560 = vlaneseq
    %v561 = vshrl.u32 %v560, 7
    %v562 = vsub.s32 0, %v561
    %v563 = vrot.slane %v558, %v562
    %565 = vmatprep.subr.mxu0 0.0
    %566 = vmatpush1.msra.mxu0 %v542
    %567 = vmatprep.subr.mxu0 0.0
    %568 = vmatpush1.msra.mxu0 %v543
    %569 = vmatprep.subr.mxu0 0.0
    %570 = vmatpush1.msra.mxu0 %v544
    %571 = vmatprep.subr.mxu0 0.0
    %572 = vmatpush1.msra.mxu0 %v545
    %573 = vmatprep.subr.mxu0 0.0
    %574 = vmatpush1.msra.mxu0 %v546
    %575 = vmatprep.subr.mxu0 0.0
    %576 = vmatpush1.msra.mxu0 %v547
    %577 = vmatprep.subr.mxu0 0.0
    %578 = vmatpush1.msra.mxu0 %v548
    %579 = vmatprep.subr.mxu0 0.0
    %580 = vmatpush1.msra.mxu0 %v549
    %581 = vmatprep.subr.mxu0 0.0
    %582 = vmatpush1.msra.mxu0 %v550
    %583 = vmatprep.subr.mxu0 0.0
    %584 = vmatpush1.msra.mxu0 %v551
    %585 = vmatprep.subr.mxu0 0.0
    %586 = vmatpush1.msra.mxu0 %v552
    %587 = vmatprep.subr.mxu0 0.0
    %588 = vmatpush1.msra.mxu0 %v553
    %589 = vmatprep.subr.mxu0 0.0
    %590 = vmatpush1.msra.mxu0 %v554
    %591 = vmatprep.subr.mxu0 0.0
    %592 = vmatpush1.msra.mxu0 %v555
    %593 = vmatprep.subr.mxu0 0.0
    %594 = vmatpush1.msra.mxu0 %v556
    %595 = vmatprep.subr.mxu0 0.0
    %596 = vmatpush1.msra.mxu0 %v557
    %597 = vmatprep.subr.mxu0 0.0
    %598 = vmatpush1.msra.mxu0 0.0
    %599 = vmatprep.subr.mxu0 0.0
    %600 = vmatpush1.msra.mxu0 0.0
    %601 = vmatprep.subr.mxu0 0.0
    %602 = vmatpush1.msra.mxu0 0.0
    %603 = vmatprep.subr.mxu0 0.0
    %604 = vmatpush1.msra.mxu0 0.0
    %605 = vmatprep.subr.mxu0 0.0
    %606 = vmatpush1.msra.mxu0 0.0
    %607 = vmatprep.subr.mxu0 0.0
    %608 = vmatpush1.msra.mxu0 0.0
    %609 = vmatprep.subr.mxu0 0.0
    %610 = vmatpush1.msra.mxu0 0.0
    %611 = vmatprep.subr.mxu0 0.0
    %612 = vmatpush1.msra.mxu0 0.0
    %613 = vmatprep.subr.mxu0 0.0
    %614 = vmatpush1.msra.mxu0 0.0
    %615 = vmatprep.subr.mxu0 0.0
    %616 = vmatpush1.msra.mxu0 0.0
    %617 = vmatprep.subr.mxu0 0.0
    %618 = vmatpush1.msra.mxu0 0.0
    %619 = vmatprep.subr.mxu0 0.0
    %620 = vmatpush1.msra.mxu0 0.0
    %621 = vmatprep.subr.mxu0 0.0
    %622 = vmatpush1.msra.mxu0 0.0
    %623 = vmatprep.subr.mxu0 0.0
    %624 = vmatpush1.msra.mxu0 0.0
    %625 = vmatprep.subr.mxu0 0.0
    %626 = vmatpush1.msra.mxu0 0.0
    %627 = vmatprep.subr.mxu0 0.0
    %628 = vmatpush1.msra.mxu0 0.0
    %629 = vmatprep.mubr.f32.mxu0 0.0
    %630 = vmatmul.mubr.f32.gmra.mrb[0].mxu0 %v541
    %v631 = vpop.f32.mrb[0].mxu0
    %v632 = vadd.f32 %v563, %v631
    %v633 = vpop.f32.mrb[0].mxu0
    %634 = vdwg.mxu0
    %v635 = vmax.f32 %v632, 0.0
    %v636 = vld [vmem:[#allocation8] sm:$0xff]
    %v637 = vld [vmem:[#allocation8 + $0x8] sm:$0xff]
    %v638 = vld [vmem:[#allocation8 + $0x10] sm:$0xff]
    %v639 = vld [vmem:[#allocation8 + $0x18] sm:$0xff]
    %v640 = vld [vmem:[#allocation8 + $0x20] sm:$0xff]
    %v641 = vld [vmem:[#allocation8 + $0x28] sm:$0xff]
    %v642 = vld [vmem:[#allocation8 + $0x30] sm:$0xff]
    %v643 = vld [vmem:[#allocation8 + $0x38] sm:$0xff]
    %v644 = vld [vmem:[#allocation8 + $0x40] sm:$0xff]
    %v645 = vld [vmem:[#allocation8 + $0x48] sm:$0xff]
    %v646 = vld [vmem:[#allocation8 + $0x50] sm:$0xff]
    %v647 = vld [vmem:[#allocation8 + $0x58] sm:$0xff]
    %v648 = vld [vmem:[#allocation8 + $0x60] sm:$0xff]
    %v649 = vld [vmem:[#allocation8 + $0x68] sm:$0xff]
    %v650 = vld [vmem:[#allocation8 + $0x70] sm:$0xff]
    %v651 = vld [vmem:[#allocation8 + $0x78] sm:$0xff]
    %v652 = vld [vmem:[%s6] sm:$0x1]
    %v654 = vlaneseq
    %v655 = vshrl.u32 %v654, 7
    %v656 = vsub.s32 0, %v655
    %v657 = vrot.slane %v652, %v656
    %659 = vmatprep.subr.mxu0 0.0
    %660 = vmatpush1.msra.mxu0 %v636
    %661 = vmatprep.subr.mxu0 0.0
    %662 = vmatpush1.msra.mxu0 %v637
    %663 = vmatprep.subr.mxu0 0.0
    %664 = vmatpush1.msra.mxu0 %v638
    %665 = vmatprep.subr.mxu0 0.0
    %666 = vmatpush1.msra.mxu0 %v639
    %667 = vmatprep.subr.mxu0 0.0
    %668 = vmatpush1.msra.mxu0 %v640
    %669 = vmatprep.subr.mxu0 0.0
    %670 = vmatpush1.msra.mxu0 %v641
    %671 = vmatprep.subr.mxu0 0.0
    %672 = vmatpush1.msra.mxu0 %v642
    %673 = vmatprep.subr.mxu0 0.0
    %674 = vmatpush1.msra.mxu0 %v643
    %675 = vmatprep.subr.mxu0 0.0
    %676 = vmatpush1.msra.mxu0 %v644
    %677 = vmatprep.subr.mxu0 0.0
    %678 = vmatpush1.msra.mxu0 %v645
    %679 = vmatprep.subr.mxu0 0.0
    %680 = vmatpush1.msra.mxu0 %v646
    %681 = vmatprep.subr.mxu0 0.0
    %682 = vmatpush1.msra.mxu0 %v647
    %683 = vmatprep.subr.mxu0 0.0
    %684 = vmatpush1.msra.mxu0 %v648
    %685 = vmatprep.subr.mxu0 0.0
    %686 = vmatpush1.msra.mxu0 %v649
    %687 = vmatprep.subr.mxu0 0.0
    %688 = vmatpush1.msra.mxu0 %v650
    %689 = vmatprep.subr.mxu0 0.0
    %690 = vmatpush1.msra.mxu0 %v651
    %691 = vmatprep.subr.mxu0 0.0
    %692 = vmatpush1.msra.mxu0 0.0
    %693 = vmatprep.subr.mxu0 0.0
    %694 = vmatpush1.msra.mxu0 0.0
    %695 = vmatprep.subr.mxu0 0.0
    %696 = vmatpush1.msra.mxu0 0.0
    %697 = vmatprep.subr.mxu0 0.0
    %698 = vmatpush1.msra.mxu0 0.0
    %699 = vmatprep.subr.mxu0 0.0
    %700 = vmatpush1.msra.mxu0 0.0
    %701 = vmatprep.subr.mxu0 0.0
    %702 = vmatpush1.msra.mxu0 0.0
    %703 = vmatprep.subr.mxu0 0.0
    %704 = vmatpush1.msra.mxu0 0.0
    %705 = vmatprep.subr.mxu0 0.0
    %706 = vmatpush1.msra.mxu0 0.0
    %707 = vmatprep.subr.mxu0 0.0
    %708 = vmatpush1.msra.mxu0 0.0
    %709 = vmatprep.subr.mxu0 0.0
    %710 = vmatpush1.msra.mxu0 0.0
    %711 = vmatprep.subr.mxu0 0.0
    %712 = vmatpush1.msra.mxu0 0.0
    %713 = vmatprep.subr.mxu0 0.0
    %714 = vmatpush1.msra.mxu0 0.0
    %715 = vmatprep.subr.mxu0 0.0
    %716 = vmatpush1.msra.mxu0 0.0
    %717 = vmatprep.subr.mxu0 0.0
    %718 = vmatpush1.msra.mxu0 0.0
    %719 = vmatprep.subr.mxu0 0.0
    %720 = vmatpush1.msra.mxu0 0.0
    %721 = vmatprep.subr.mxu0 0.0
    %722 = vmatpush1.msra.mxu0 0.0
    %723 = vmatprep.mubr.f32.mxu0 0.0
    %724 = vmatmul.mubr.f32.gmra.mrb[0].mxu0 %v635
    %v725 = vpop.f32.mrb[0].mxu0
    %v726 = vadd.f32 %v657, %v725
    %v727 = vpop.f32.mrb[0].mxu0
    %728 = vdwg.mxu0
    %729 = vst [vmem:[#allocation10] sm:$0x3] %v726
    // Predicated region
    $region46: #{tpu_custom_call.1} parent=1 // pred_check
      _
    $region47: #{tpu_custom_call.1} parent=1 // pred_check_branch
      %731 = sbr.rel (0) target = $region49
    $region48: #{tpu_custom_call.1} parent=1 // pred_region
      %s733 = ssub.s32 32, 32
      %734 = vsyncadd [#allocation4], %s733
      %s736 = sshll.u32 [#allocation10], 4
      %s737 = int_to_ptr.vmem [resolvable:$true] %s736
      %739 = dma.vmem_to_hbm [thread:$0]  %s737, 32, %s7, [#allocation4]
    $region49: #{tpu_custom_call.1} parent=1 // pred_fallthru
      _
    // Predicated region
    $region50: #{tpu_custom_call.1} parent=1 // pred_check
      _
    $region51: #{tpu_custom_call.1} parent=1 // pred_check_branch
      %741 = sbr.rel (0) target = $region53
    $region52: #{tpu_custom_call.1} parent=1 // pred_region
      %742 = dma.done [#allocation4], 32
    $region53: #{tpu_custom_call.1} parent=1 // pred_fallthru
      _
    %743 = vsyncpa [#allocation3], 1
    %744 = vsyncpa [#allocation6], 1
    %745 = vsyncpa [#allocation9], 1
    %746 = vsyncpa [#allocation4], 1

</llo_original>
